<compile_context>
chip_gen: v7x
topology: tpu7x:2x2x1
jax: 0.10.0
libtpu: 0.0.40
codegen_flags: <defaults>
</compile_context>

<pallas_src>
import functools

import jax
import jax.numpy as jnp
from jax.experimental import pallas as pl
from jax.experimental.pallas import tpu as pltpu


def _round_up(x, m):
    return (x + m - 1) // m * m


# ----------------------------------------------------------------------------
# Pallas kernel: one GCNConv layer,  H[i,:] = sum_k A[i,k] @ (relu?(X[k]) @ W) + b
# ----------------------------------------------------------------------------
def gcn_layer_kernel(a_ref, x_ref, w_ref, b_ref, o_ref, acc_ref, *, relu_input):
    k = pl.program_id(1)

    @pl.when(k == 0)
    def _():
        acc_ref[...] = jnp.zeros_like(acc_ref)

    x = x_ref[...]                                   # (TK, Cin_p) f32
    if relu_input:
        x = jnp.maximum(x, 0.0)

    # feature transform of this column tile: Z_k = X_k @ W   (bf16 MXU, f32 out)
    z = jnp.dot(x.astype(jnp.bfloat16), w_ref[...],
                preferred_element_type=jnp.float32)

    # aggregate: acc += A[i, k] @ Z_k                 (bf16 MXU, f32 accumulate)
    acc_ref[...] += jnp.dot(a_ref[...], z.astype(jnp.bfloat16),
                            preferred_element_type=jnp.float32)

    @pl.when(k == pl.num_programs(1) - 1)
    def _():
        o_ref[...] = acc_ref[...] + b_ref[...]       # bias once per row tile


def gcn_conv(a_pad, h_pad, w_pad, b_pad, *, relu_input, tm=256, tk=256):
    """One GCNConv layer over padded, tiled operands."""
    n_pad = a_pad.shape[0]
    c_in = h_pad.shape[1]
    c_out = w_pad.shape[1]
    grid = (n_pad // tm, n_pad // tk)

    # advisory cost estimate for the XLA scheduler
    flops = 2 * n_pad * n_pad * c_out + 2 * n_pad * c_in * c_out * grid[0]
    bytes_accessed = (n_pad * n_pad * 2                # A (bf16), dominant stream
                      + n_pad * c_in * 4 * grid[0]     # X/H re-streamed per row tile
                      + n_pad * c_out * 4              # output
                      + c_in * c_out * 2 + c_out * 4)  # weights / bias

    kernel = functools.partial(gcn_layer_kernel, relu_input=relu_input)
    return pl.pallas_call(
        kernel,
        out_shape=jax.ShapeDtypeStruct((n_pad, c_out), jnp.float32),
        grid_spec=pltpu.PrefetchScalarGridSpec(
            num_scalar_prefetch=0,
            grid=grid,
            in_specs=[
                pl.BlockSpec((tm, tk), lambda i, k: (i, k)),       # A tile
                pl.BlockSpec((tk, c_in), lambda i, k: (k, 0)),     # X / H tile
                pl.BlockSpec((c_in, c_out), lambda i, k: (0, 0)),  # W (resident)
                pl.BlockSpec((1, c_out), lambda i, k: (0, 0)),     # b (resident)
            ],
            out_specs=pl.BlockSpec((tm, c_out), lambda i, k: (i, 0)),
            scratch_shapes=[pltpu.VMEM((tm, c_out), jnp.float32)],
        ),
        compiler_params=pltpu.CompilerParams(
            dimension_semantics=("parallel", "arbitrary")),
        cost_estimate=pl.CostEstimate(
            flops=flops, transcendentals=0, bytes_accessed=bytes_accessed),
    )(a_pad, h_pad, w_pad, b_pad)


# ----------------------------------------------------------------------------
# Dense normalized adjacency (GCNConv default: self-loops + symmetric norm).
# Built ONCE per graph and passed into the forward (hoisted off the hot path).
# TODO(synk): for large sparse graphs replace the dense O(N^2) A with a
#             scalar-prefetch gather / segment-sum formulation.
# ----------------------------------------------------------------------------
def build_normalized_adjacency(edge_index, num_nodes):
    src = edge_index[0]
    dst = edge_index[1]
    loops = jnp.arange(num_nodes, dtype=edge_index.dtype)
    src = jnp.concatenate([src, loops])
    dst = jnp.concatenate([dst, loops])
    a = jnp.zeros((num_nodes, num_nodes), jnp.float32).at[dst, src].add(1.0)
    deg = a.sum(axis=1)
    dinv = jnp.where(deg > 0, 1.0 / jnp.sqrt(deg), 0.0)
    return dinv[:, None] * a * dinv[None, :]          # D^-1/2 (A+I) D^-1/2


# ----------------------------------------------------------------------------
# Parameter init (glorot-uniform like GCNConv's Linear, zero bias)
# ----------------------------------------------------------------------------
def init_encoder_params(key, in_channels, out_channels):
    def glorot(k, fan_in, fan_out):
        limit = jnp.sqrt(6.0 / (fan_in + fan_out))
        return jax.random.uniform(k, (fan_in, fan_out), jnp.float32,
                                  minval=-limit, maxval=limit)

    k1, k2, k3 = jax.random.split(key, 3)
    c_hidden = 2 * out_channels
    w1 = glorot(k1, in_channels, c_hidden)
    b1 = jnp.zeros((c_hidden,), jnp.float32)
    w2 = glorot(k2, c_hidden, c_hidden)
    b2 = jnp.zeros((c_hidden,), jnp.float32)
    w3 = glorot(k3, c_hidden, out_channels)
    b3 = jnp.zeros((out_channels,), jnp.float32)
    return (w1, b1, w2, b2, w3, b3)


# ----------------------------------------------------------------------------
# Encoder forward: pad/cast once, run three tiled layer kernels, slice+concat.
# ----------------------------------------------------------------------------
def encoder_forward(x, a_hat, params, *, tm=256, tk=256):
    w1, b1, w2, b2, w3, b3 = params
    n, c_in = x.shape
    c_hid = w1.shape[1]
    c_out = w3.shape[1]

    LANE = 128
    n_pad = _round_up(n, max(tm, tk))
    c_in_p = _round_up(c_in, LANE)
    c_hid_p = _round_up(c_hid, LANE)
    c_out_p = _round_up(c_out, LANE)

    # A is the bandwidth-dominant stream -> bf16; zero padding keeps math exact.
    a_pad = jnp.zeros((n_pad, n_pad), jnp.bfloat16)
    a_pad = a_pad.at[:n, :n].set(a_hat.astype(jnp.bfloat16))
    x_pad = jnp.zeros((n_pad, c_in_p), jnp.float32).at[:n, :c_in].set(x)

    def pad_w(w, ci_p, co_p):
        wp = jnp.zeros((ci_p, co_p), jnp.bfloat16)
        return wp.at[:w.shape[0], :w.shape[1]].set(w.astype(jnp.bfloat16))

    def pad_b(b, co_p):
        return jnp.zeros((1, co_p), jnp.float32).at[0, :b.shape[0]].set(b)

    w1p, b1p = pad_w(w1, c_in_p, c_hid_p), pad_b(b1, c_hid_p)
    w2p, b2p = pad_w(w2, c_hid_p, c_hid_p), pad_b(b2, c_hid_p)
    w3p, b3p = pad_w(w3, c_hid_p, c_out_p), pad_b(b3, c_out_p)

    h1 = gcn_conv(a_pad, x_pad, w1p, b1p, relu_input=False, tm=tm, tk=tk)
    h2 = gcn_conv(a_pad, h1, w2p, b2p, relu_input=True, tm=tm, tk=tk)
    h3 = gcn_conv(a_pad, h2, w3p, b3p, relu_input=True, tm=tm, tk=tk)

    # torch.cat([conv3(.), x2, x1], -1)  -- tiny, done on the sliced-off views
    return jnp.concatenate(
        [h3[:n, :c_out], h2[:n, :c_hid], h1[:n, :c_hid]], axis=-1)


if __name__ == "__main__":
    # Small deterministic problem: 16 nodes, 4 input channels, out_channels=8
    # -> output embedding width = 8 + 16 + 16 = 40 (= 5 * out_channels)
    in_channels = 4
    out_channels = 8
    num_nodes = 16
    num_edges = 32

    key = jax.random.PRNGKey(0)
    kx, ke, kp = jax.random.split(key, 3)

    x = jax.random.normal(kx, (num_nodes, in_channels), jnp.float32)
    edge_index = jax.random.randint(ke, (2, num_edges), 0, num_nodes,
                                    dtype=jnp.int32)
    params = init_encoder_params(kp, in_channels, out_channels)

    # adjacency built once per graph (hoisted out of the forward hot path)
    a_hat = build_normalized_adjacency(edge_index, num_nodes)

    out = encoder_forward(x, a_hat, params)
    out = jax.block_until_ready(out)
    assert out.shape == (num_nodes, 5 * out_channels), out.shape

    # pure-JAX f32 reference (bf16 A/MXU operands -> loose tolerance)
    w1, b1, w2, b2, w3, b3 = params
    r1 = a_hat @ (x @ w1) + b1
    r2 = a_hat @ (jnp.maximum(r1, 0.0) @ w2) + b2
    r3 = a_hat @ (jnp.maximum(r2, 0.0) @ w3) + b3
    ref = jnp.concatenate([r3, r2, r1], axis=-1)
    max_err = float(jnp.max(jnp.abs(out - ref)))
    assert jnp.allclose(out, ref, rtol=5e-2, atol=5e-2), max_err

    print("KERNEL_OK")
</pallas_src>

<mosaic_0001>
module attributes {stable_mosaic.version = 11 : i64} {
  func.func @gcn_layer_kernel(%arg0: i32, %arg1: i32, %arg2: memref<256x256xbf16, #tpu.memory_space<vmem>>, %arg3: memref<256x128xf32, #tpu.memory_space<vmem>>, %arg4: memref<128x128xbf16, #tpu.memory_space<vmem>>, %arg5: memref<1x128xf32, #tpu.memory_space<vmem>>, %arg6: memref<256x128xf32, #tpu.memory_space<vmem>>, %arg7: memref<256x128xf32, #tpu.memory_space<vmem>>) attributes {dimension_semantics = [#tpu.dimension_semantics<parallel>, #tpu.dimension_semantics<arbitrary>], iteration_bounds = array<i64: 1, 1>, scalar_prefetch = 0 : i64, scratch_operands = 1 : i64, tpu.core_type = #tpu.core_type<tc>, window_params = [{transform_indices = @transform_0, window_bounds = array<i64: 256, 256>}, {transform_indices = @transform_1, window_bounds = array<i64: 256, 128>}, {pipeline_mode = #tpu.pipeline_mode<synchronous>, transform_indices = @transform_2, window_bounds = array<i64: 128, 128>}, {pipeline_mode = #tpu.pipeline_mode<synchronous>, transform_indices = @transform_3, window_bounds = array<i64: 1, 128>}, {transform_indices = @transform_4, window_bounds = array<i64: 256, 128>}]} {
    %c0_i32 = arith.constant 0 : i32
    %0 = arith.cmpi eq, %arg1, %c0_i32 : i32
    %1 = arith.extui %0 : i1 to i32
    %c0_i32_0 = arith.constant 0 : i32
    %2 = arith.cmpi ne, %1, %c0_i32_0 : i32
    scf.if %2 {
      %cst_13 = arith.constant 0.000000e+00 : f32
      %16 = vector.broadcast %cst_13 : f32 to vector<256x128xf32>
      %c0_14 = arith.constant 0 : index
      %c0_15 = arith.constant 0 : index
      %17 = vector.load %arg7[%c0_14, %c0_15] : memref<256x128xf32, #tpu.memory_space<vmem>>, vector<256x128xf32>
      tpu.vector_store %arg7[%c0_14, %c0_15], %16 {strides = array<i32>} : memref<256x128xf32, #tpu.memory_space<vmem>>, vector<256x128xf32>,
    } else {
    }
    %c0 = arith.constant 0 : index
    %c0_1 = arith.constant 0 : index
    %3 = vector.load %arg3[%c0, %c0_1] : memref<256x128xf32, #tpu.memory_space<vmem>>, vector<256x128xf32>
    %4 = arith.truncf %3 : vector<256x128xf32> to vector<256x128xbf16>
    %c0_2 = arith.constant 0 : index
    %c0_3 = arith.constant 0 : index
    %5 = vector.load %arg4[%c0_2, %c0_3] : memref<128x128xbf16, #tpu.memory_space<vmem>>, vector<128x128xbf16>
    %cst = arith.constant dense<0.000000e+00> : vector<256x128xf32>
    %6 = tpu.matmul %4, %5, %cst {dimension_numbers = #tpu.dot_dimension_numbers<[1], [0], [0], [1], [0, 0, 1, 1], [], []>} : vector<256x128xbf16>, vector<128x128xbf16>, vector<256x128xf32> -> vector<256x128xf32>
    %c0_4 = arith.constant 0 : index
    %c0_5 = arith.constant 0 : index
    %7 = vector.load %arg7[%c0_4, %c0_5] : memref<256x128xf32, #tpu.memory_space<vmem>>, vector<256x128xf32>
    %c0_6 = arith.constant 0 : index
    %c0_7 = arith.constant 0 : index
    %8 = vector.load %arg2[%c0_6, %c0_7] : memref<256x256xbf16, #tpu.memory_space<vmem>>, vector<256x256xbf16>
    %9 = arith.truncf %6 : vector<256x128xf32> to vector<256x128xbf16>
    %cst_8 = arith.constant dense<0.000000e+00> : vector<256x128xf32>
    %10 = tpu.matmul %8, %9, %cst_8 {dimension_numbers = #tpu.dot_dimension_numbers<[1], [0], [0], [1], [0, 0, 1, 1], [], []>} : vector<256x256xbf16>, vector<256x128xbf16>, vector<256x128xf32> -> vector<256x128xf32>
    %11 = arith.addf %7, %10 : vector<256x128xf32>
    %c0_9 = arith.constant 0 : index
    %c0_10 = arith.constant 0 : index
    %12 = vector.load %arg7[%c0_9, %c0_10] : memref<256x128xf32, #tpu.memory_space<vmem>>, vector<256x128xf32>
    tpu.vector_store %arg7[%c0_9, %c0_10], %11 {strides = array<i32>} : memref<256x128xf32, #tpu.memory_space<vmem>>, vector<256x128xf32>,
    %c0_i32_11 = arith.constant 0 : i32
    %13 = arith.cmpi eq, %arg1, %c0_i32_11 : i32
    %14 = arith.extui %13 : i1 to i32
    %c0_i32_12 = arith.constant 0 : i32
    %15 = arith.cmpi ne, %14, %c0_i32_12 : i32
    scf.if %15 {
      %c0_13 = arith.constant 0 : index
      %c0_14 = arith.constant 0 : index
      %16 = vector.load %arg7[%c0_13, %c0_14] : memref<256x128xf32, #tpu.memory_space<vmem>>, vector<256x128xf32>
      %c0_15 = arith.constant 0 : index
      %c0_16 = arith.constant 0 : index
      %17 = vector.load %arg5[%c0_15, %c0_16] : memref<1x128xf32, #tpu.memory_space<vmem>>, vector<1x128xf32>
      %18 = vector.broadcast %17 : vector<1x128xf32> to vector<256x128xf32>
      %19 = arith.addf %16, %18 : vector<256x128xf32>
      %c0_17 = arith.constant 0 : index
      %c0_18 = arith.constant 0 : index
      %20 = vector.load %arg6[%c0_17, %c0_18] : memref<256x128xf32, #tpu.memory_space<vmem>>, vector<256x128xf32>
      tpu.vector_store %arg6[%c0_17, %c0_18], %19 {strides = array<i32>} : memref<256x128xf32, #tpu.memory_space<vmem>>, vector<256x128xf32>,
    } else {
    }
    return
  }
  func.func @transform_0(%arg0: i32, %arg1: i32) -> (i32, i32) {
    %c0_i32 = arith.constant 0 : i32
    return %arg0, %arg1 : i32, i32
  }
  func.func @transform_1(%arg0: i32, %arg1: i32) -> (i32, i32) {
    %c0_i32 = arith.constant 0 : i32
    %c0_i32_0 = arith.constant 0 : i32
    return %arg1, %c0_i32 : i32, i32
  }
  func.func @transform_2(%arg0: i32, %arg1: i32) -> (i32, i32) {
    %c0_i32 = arith.constant 0 : i32
    %c0_i32_0 = arith.constant 0 : i32
    %c0_i32_1 = arith.constant 0 : i32
    return %c0_i32, %c0_i32_0 : i32, i32
  }
  func.func @transform_3(%arg0: i32, %arg1: i32) -> (i32, i32) {
    %c0_i32 = arith.constant 0 : i32
    %c0_i32_0 = arith.constant 0 : i32
    %c0_i32_1 = arith.constant 0 : i32
    return %c0_i32, %c0_i32_0 : i32, i32
  }
  func.func @transform_4(%arg0: i32, %arg1: i32) -> (i32, i32) {
    %c0_i32 = arith.constant 0 : i32
    %c0_i32_0 = arith.constant 0 : i32
    return %arg0, %c0_i32 : i32, i32
  }
}

</mosaic_0001>

<llo_original>
// kernel: tpu_custom_call.1
$region0: #{tpu_custom_call.1}
  #allocation0 [shape = 'u32[]', space=smem, size = 0x4, offset = 0x4, fixed_abs, tag = 'smem constant byte address 0x4 - core index']
  #allocation1 [shape = 'u32[144,128]{1,0:T(1,128)}', space=vmem, size = 0x12000, scoped, tag = 'internal scratch']
  #allocation2 [shape = 'f32[256,128]{1,0:T(8,128)}', space=vmem, size = 0x20000, scoped, tag = 'scratch operand']
  %s0 = inlined_call_operand.hbm [shape: bf16[256,256], index: 0, kind: input, shape index: {}]
  %s1 = inlined_call_operand.hbm [shape: f32[256,128], index: 1, kind: input, shape index: {}]
  %s2 = inlined_call_operand.hbm [shape: bf16[128,128], index: 2, kind: input, shape index: {}]
  %s3 = inlined_call_operand.vmem [shape: f32[1,128], index: 3, kind: input, shape index: {}]
  %s4 = inlined_call_operand.hbm [shape: f32[256,128], index: 4, kind: output, shape index: {}]
  %s5 = sld [smem:[#allocation0]]
  $region46: #{tpu_custom_call.1} parent=0
    _
  %s7 = ssub.s32 1, %s5
  %s8 = scalar_select 0, %s7, %s5
  $region1: #{tpu_custom_call.1} parent=0
    #allocation3 [shape = 'u8[131072]{0}', space=vmem, size = 0x20000, scoped, tag = 'input window, operand 0, single buffered']
    #allocation4 [shape = 's32[1]{0}', space=sflag, size = 0x4, scoped, tag = 'scoped memory for tpu_custom_call.1']
    #allocation5 [shape = 's32[1]{0}', space=sflag, size = 0x4, scoped, tag = 'scoped memory for tpu_custom_call.1']
    #allocation6 [shape = 'u8[131072]{0}', space=vmem, size = 0x20000, scoped, tag = 'input window, operand 1, single buffered']
    #allocation7 [shape = 's32[1]{0}', space=sflag, size = 0x4, scoped, tag = 'scoped memory for tpu_custom_call.1']
    #allocation8 [shape = 'u8[32768]{0}', space=vmem, size = 0x8000, scoped, tag = 'input window, operand 2, single buffered']
    #allocation9 [shape = 'u8[131072]{0}', space=vmem, size = 0x20000, scoped, tag = 'output window, operand 0, single buffered']
    %9 = vsyncpa [#allocation4], 0
    %10 = vsyncpa [#allocation7], 0
    %11 = vsyncpa [#allocation5], 0
    // Predicated region
    $region2: #{tpu_custom_call.1} parent=1 // pred_check
      _
    $region3: #{tpu_custom_call.1} parent=1 // pred_check_branch
      %13 = sbr.rel (0) target = $region5
    $region4: #{tpu_custom_call.1} parent=1 // pred_region
      %s15 = ssub.s32 4096, 4096
      %16 = vsyncadd [#allocation4], %s15
      %s17 = sshll.u32 [#allocation3], 4
      %s18 = int_to_ptr.vmem [resolvable:$true] %s17
      %23 = dma.hbm_to_vmem [thread:$0]  %s0, 4096, %s18, [#allocation4], 128, 128, 8
    $region5: #{tpu_custom_call.1} parent=1 // pred_fallthru
      _
    // Predicated region
    $region6: #{tpu_custom_call.1} parent=1 // pred_check
      _
    $region7: #{tpu_custom_call.1} parent=1 // pred_check_branch
      %25 = sbr.rel (0) target = $region9
    $region8: #{tpu_custom_call.1} parent=1 // pred_region
      %s27 = ssub.s32 4096, 4096
      %28 = vsyncadd [#allocation7], %s27
      %s29 = sshll.u32 [#allocation6], 4
      %s30 = int_to_ptr.vmem [resolvable:$true] %s29
      %35 = dma.hbm_to_vmem [thread:$0]  %s1, 4096, %s30, [#allocation7], 128, 128, 8
    $region9: #{tpu_custom_call.1} parent=1 // pred_fallthru
      _
    // Predicated region
    $region10: #{tpu_custom_call.1} parent=1 // pred_check
      _
    $region11: #{tpu_custom_call.1} parent=1 // pred_check_branch
      %37 = sbr.rel (0) target = $region13
    $region12: #{tpu_custom_call.1} parent=1 // pred_region
      %s39 = ssub.s32 1024, 1024
      %40 = vsyncadd [#allocation7], %s39
      %s41 = sshll.u32 [#allocation8], 4
      %s42 = int_to_ptr.vmem [resolvable:$true] %s41
      %47 = dma.hbm_to_vmem [thread:$0]  %s2, 1024, %s42, [#allocation7], 64, 64, 4
    $region13: #{tpu_custom_call.1} parent=1 // pred_fallthru
      _
    // Predicated region
    $region14: #{tpu_custom_call.1} parent=1 // pred_check
      _
    $region15: #{tpu_custom_call.1} parent=1 // pred_check_branch
      %49 = sbr.rel (0) target = $region17
    $region16: #{tpu_custom_call.1} parent=1 // pred_region
      _
    $region17: #{tpu_custom_call.1} parent=1 // pred_fallthru
      _
    // Predicated region
    $region18: #{tpu_custom_call.1} parent=1 // pred_check
      _
    $region19: #{tpu_custom_call.1} parent=1 // pred_check_branch
      %51 = sbr.rel (0) target = $region21
    $region20: #{tpu_custom_call.1} parent=1 // pred_region
      %52 = dma.done [#allocation4], 4096
    $region21: #{tpu_custom_call.1} parent=1 // pred_fallthru
      _
    // Predicated region
    $region22: #{tpu_custom_call.1} parent=1 // pred_check
      _
    $region23: #{tpu_custom_call.1} parent=1 // pred_check_branch
      %54 = sbr.rel (0) target = $region25
    $region24: #{tpu_custom_call.1} parent=1 // pred_region
      %55 = dma.done [#allocation7], 4096
    $region25: #{tpu_custom_call.1} parent=1 // pred_fallthru
      _
    // Predicated region
    $region26: #{tpu_custom_call.1} parent=1 // pred_check
      _
    $region27: #{tpu_custom_call.1} parent=1 // pred_check_branch
      %57 = sbr.rel (0) target = $region29
    $region28: #{tpu_custom_call.1} parent=1 // pred_region
      %58 = dma.done [#allocation7], 1024
    $region29: #{tpu_custom_call.1} parent=1 // pred_fallthru
      _
    %p60 = scmp.eq.s32.totalorder 0, 0
    // Predicated region
    $region30: #{tpu_custom_call.1} parent=1 // pred_check
      %p61 = pneg %p60
    $region31: #{tpu_custom_call.1} parent=1 // pred_check_branch
      %63 = sbr.rel (%p61) target = $region33
    $region32: #{tpu_custom_call.1} parent=1 // pred_region
      %64 = vst [vmem:[#allocation2] sm:$0xff] 0.0
      %65 = vst [vmem:[#allocation2 + $0x8] sm:$0xff] 0.0
      %66 = vst [vmem:[#allocation2 + $0x10] sm:$0xff] 0.0
      %67 = vst [vmem:[#allocation2 + $0x18] sm:$0xff] 0.0
      %68 = vst [vmem:[#allocation2 + $0x20] sm:$0xff] 0.0
      %69 = vst [vmem:[#allocation2 + $0x28] sm:$0xff] 0.0
      %70 = vst [vmem:[#allocation2 + $0x30] sm:$0xff] 0.0
      %71 = vst [vmem:[#allocation2 + $0x38] sm:$0xff] 0.0
      %72 = vst [vmem:[#allocation2 + $0x40] sm:$0xff] 0.0
      %73 = vst [vmem:[#allocation2 + $0x48] sm:$0xff] 0.0
      %74 = vst [vmem:[#allocation2 + $0x50] sm:$0xff] 0.0
      %75 = vst [vmem:[#allocation2 + $0x58] sm:$0xff] 0.0
      %76 = vst [vmem:[#allocation2 + $0x60] sm:$0xff] 0.0
      %77 = vst [vmem:[#allocation2 + $0x68] sm:$0xff] 0.0
      %78 = vst [vmem:[#allocation2 + $0x70] sm:$0xff] 0.0
      %79 = vst [vmem:[#allocation2 + $0x78] sm:$0xff] 0.0
      %80 = vst [vmem:[#allocation2 + $0x80] sm:$0xff] 0.0
      %81 = vst [vmem:[#allocation2 + $0x88] sm:$0xff] 0.0
      %82 = vst [vmem:[#allocation2 + $0x90] sm:$0xff] 0.0
      %83 = vst [vmem:[#allocation2 + $0x98] sm:$0xff] 0.0
      %84 = vst [vmem:[#allocation2 + $0xa0] sm:$0xff] 0.0
      %85 = vst [vmem:[#allocation2 + $0xa8] sm:$0xff] 0.0
      %86 = vst [vmem:[#allocation2 + $0xb0] sm:$0xff] 0.0
      %87 = vst [vmem:[#allocation2 + $0xb8] sm:$0xff] 0.0
      %88 = vst [vmem:[#allocation2 + $0xc0] sm:$0xff] 0.0
      %89 = vst [vmem:[#allocation2 + $0xc8] sm:$0xff] 0.0
      %90 = vst [vmem:[#allocation2 + $0xd0] sm:$0xff] 0.0
      %91 = vst [vmem:[#allocation2 + $0xd8] sm:$0xff] 0.0
      %92 = vst [vmem:[#allocation2 + $0xe0] sm:$0xff] 0.0
      %93 = vst [vmem:[#allocation2 + $0xe8] sm:$0xff] 0.0
      %94 = vst [vmem:[#allocation2 + $0xf0] sm:$0xff] 0.0
      %95 = vst [vmem:[#allocation2 + $0xf8] sm:$0xff] 0.0
    $region33: #{tpu_custom_call.1} parent=1 // pred_fallthru
      _
    %v96 = vld [vmem:[#allocation6] sm:$0xff]
    %v97 = vld [vmem:[#allocation6 + $0x8] sm:$0xff]
    %v98 = vld [vmem:[#allocation6 + $0x10] sm:$0xff]
    %v99 = vld [vmem:[#allocation6 + $0x18] sm:$0xff]
    %v100 = vld [vmem:[#allocation6 + $0x20] sm:$0xff]
    %v101 = vld [vmem:[#allocation6 + $0x28] sm:$0xff]
    %v102 = vld [vmem:[#allocation6 + $0x30] sm:$0xff]
    %v103 = vld [vmem:[#allocation6 + $0x38] sm:$0xff]
    %v104 = vld [vmem:[#allocation6 + $0x40] sm:$0xff]
    %v105 = vld [vmem:[#allocation6 + $0x48] sm:$0xff]
    %v106 = vld [vmem:[#allocation6 + $0x50] sm:$0xff]
    %v107 = vld [vmem:[#allocation6 + $0x58] sm:$0xff]
    %v108 = vld [vmem:[#allocation6 + $0x60] sm:$0xff]
    %v109 = vld [vmem:[#allocation6 + $0x68] sm:$0xff]
    %v110 = vld [vmem:[#allocation6 + $0x70] sm:$0xff]
    %v111 = vld [vmem:[#allocation6 + $0x78] sm:$0xff]
    %v112 = vld [vmem:[#allocation6 + $0x80] sm:$0xff]
    %v113 = vld [vmem:[#allocation6 + $0x88] sm:$0xff]
    %v114 = vld [vmem:[#allocation6 + $0x90] sm:$0xff]
    %v115 = vld [vmem:[#allocation6 + $0x98] sm:$0xff]
    %v116 = vld [vmem:[#allocation6 + $0xa0] sm:$0xff]
    %v117 = vld [vmem:[#allocation6 + $0xa8] sm:$0xff]
    %v118 = vld [vmem:[#allocation6 + $0xb0] sm:$0xff]
    %v119 = vld [vmem:[#allocation6 + $0xb8] sm:$0xff]
    %v120 = vld [vmem:[#allocation6 + $0xc0] sm:$0xff]
    %v121 = vld [vmem:[#allocation6 + $0xc8] sm:$0xff]
    %v122 = vld [vmem:[#allocation6 + $0xd0] sm:$0xff]
    %v123 = vld [vmem:[#allocation6 + $0xd8] sm:$0xff]
    %v124 = vld [vmem:[#allocation6 + $0xe0] sm:$0xff]
    %v125 = vld [vmem:[#allocation6 + $0xe8] sm:$0xff]
    %v126 = vld [vmem:[#allocation6 + $0xf0] sm:$0xff]
    %v127 = vld [vmem:[#allocation6 + $0xf8] sm:$0xff]
    %v128 = vpack.c.bf16 %v97, %v96
    %v129 = vpack.c.bf16 %v99, %v98
    %v130 = vpack.c.bf16 %v101, %v100
    %v131 = vpack.c.bf16 %v103, %v102
    %v132 = vpack.c.bf16 %v105, %v104
    %v133 = vpack.c.bf16 %v107, %v106
    %v134 = vpack.c.bf16 %v109, %v108
    %v135 = vpack.c.bf16 %v111, %v110
    %v136 = vpack.c.bf16 %v113, %v112
    %v137 = vpack.c.bf16 %v115, %v114
    %v138 = vpack.c.bf16 %v117, %v116
    %v139 = vpack.c.bf16 %v119, %v118
    %v140 = vpack.c.bf16 %v121, %v120
    %v141 = vpack.c.bf16 %v123, %v122
    %v142 = vpack.c.bf16 %v125, %v124
    %v143 = vpack.c.bf16 %v127, %v126
    %v144 = vld [vmem:[#allocation8] sm:$0xf]
    %v145 = vld [vmem:[#allocation8 + $0x4] sm:$0xf]
    %v146 = vld [vmem:[#allocation8 + $0x8] sm:$0xf]
    %v147 = vld [vmem:[#allocation8 + $0xc] sm:$0xf]
    %v148 = vld [vmem:[#allocation8 + $0x10] sm:$0xf]
    %v149 = vld [vmem:[#allocation8 + $0x14] sm:$0xf]
    %v150 = vld [vmem:[#allocation8 + $0x18] sm:$0xf]
    %v151 = vld [vmem:[#allocation8 + $0x1c] sm:$0xf]
    %v152 = vld [vmem:[#allocation8 + $0x20] sm:$0xf]
    %v153 = vld [vmem:[#allocation8 + $0x24] sm:$0xf]
    %v154 = vld [vmem:[#allocation8 + $0x28] sm:$0xf]
    %v155 = vld [vmem:[#allocation8 + $0x2c] sm:$0xf]
    %v156 = vld [vmem:[#allocation8 + $0x30] sm:$0xf]
    %v157 = vld [vmem:[#allocation8 + $0x34] sm:$0xf]
    %v158 = vld [vmem:[#allocation8 + $0x38] sm:$0xf]
    %v159 = vld [vmem:[#allocation8 + $0x3c] sm:$0xf]
    %v176 = vunpack.c.l.b16 %v144
    %v177 = vunpack.c.l.b16 %v145
    %v178 = vunpack.c.l.b16 %v146
    %v179 = vunpack.c.l.b16 %v147
    %v180 = vunpack.c.l.b16 %v148
    %v181 = vunpack.c.l.b16 %v149
    %v182 = vunpack.c.l.b16 %v150
    %v183 = vunpack.c.l.b16 %v151
    %v184 = vunpack.c.l.b16 %v152
    %v185 = vunpack.c.l.b16 %v153
    %v186 = vunpack.c.l.b16 %v154
    %v187 = vunpack.c.l.b16 %v155
    %v188 = vunpack.c.l.b16 %v156
    %v189 = vunpack.c.l.b16 %v157
    %v190 = vunpack.c.l.b16 %v158
    %v191 = vunpack.c.l.b16 %v159
    %v192 = vpack.c.b16 %v177, %v176
    %v193 = vpack.c.b16 %v179, %v178
    %v194 = vpack.c.b16 %v181, %v180
    %v195 = vpack.c.b16 %v183, %v182
    %v196 = vpack.c.b16 %v185, %v184
    %v197 = vpack.c.b16 %v187, %v186
    %v198 = vpack.c.b16 %v189, %v188
    %v199 = vpack.c.b16 %v191, %v190
    %208 = vmatprep.subr.bf16.mxu0 0
    %209 = vmatpush1.bf16.msra.mxu0 %v192
    %210 = vmatprep.subr.bf16.mxu0 0
    %211 = vmatpush1.bf16.msra.mxu0 %v193
    %212 = vmatprep.subr.bf16.mxu0 0
    %213 = vmatpush1.bf16.msra.mxu0 %v194
    %214 = vmatprep.subr.bf16.mxu0 0
    %215 = vmatpush1.bf16.msra.mxu0 %v195
    %216 = vmatprep.subr.bf16.mxu0 0
    %217 = vmatpush1.bf16.msra.mxu0 %v196
    %218 = vmatprep.subr.bf16.mxu0 0
    %219 = vmatpush1.bf16.msra.mxu0 %v197
    %220 = vmatprep.subr.bf16.mxu0 0
    %221 = vmatpush1.bf16.msra.mxu0 %v198
    %222 = vmatprep.subr.bf16.mxu0 0
    %223 = vmatpush1.bf16.msra.mxu0 %v199
    %224 = vmatprep.subr.bf16.mxu0 0
    %225 = vmatpush1.bf16.msra.mxu0 0
    %226 = vmatprep.subr.bf16.mxu0 0
    %227 = vmatpush1.bf16.msra.mxu0 0
    %228 = vmatprep.subr.bf16.mxu0 0
    %229 = vmatpush1.bf16.msra.mxu0 0
    %230 = vmatprep.subr.bf16.mxu0 0
    %231 = vmatpush1.bf16.msra.mxu0 0
    %232 = vmatprep.subr.bf16.mxu0 0
    %233 = vmatpush1.bf16.msra.mxu0 0
    %234 = vmatprep.subr.bf16.mxu0 0
    %235 = vmatpush1.bf16.msra.mxu0 0
    %236 = vmatprep.subr.bf16.mxu0 0
    %237 = vmatpush1.bf16.msra.mxu0 0
    %238 = vmatprep.subr.bf16.mxu0 0
    %239 = vmatpush1.bf16.msra.mxu0 0
    %240 = vmatprep.mubr.bf16.mxu0 0
    %241 = vmatmul.mubr.bf16.gmra.mrb[0].mxu0 %v128
    %v242 = vpop.f32.mrb[0].mxu0
    %v243 = vadd.f32 0.0, %v242
    %v244 = vpop.f32.mrb[0].mxu0
    %v245 = vpop.f32.mrb[0].mxu0
    %v246 = vadd.f32 0.0, %v245
    %v247 = vpop.f32.mrb[0].mxu0
    %248 = vmatprep.mubr.bf16.mxu0 0
    %249 = vmatmul.mubr.bf16.gmra.mrb[0].mxu0 %v129
    %v250 = vpop.f32.mrb[0].mxu0
    %v251 = vadd.f32 0.0, %v250
    %v252 = vpop.f32.mrb[0].mxu0
    %v253 = vpop.f32.mrb[0].mxu0
    %v254 = vadd.f32 0.0, %v253
    %v255 = vpop.f32.mrb[0].mxu0
    %256 = vmatprep.mubr.bf16.mxu0 0
    %257 = vmatmul.mubr.bf16.gmra.mrb[0].mxu0 %v130
    %v258 = vpop.f32.mrb[0].mxu0
    %v259 = vadd.f32 0.0, %v258
    %v260 = vpop.f32.mrb[0].mxu0
    %v261 = vpop.f32.mrb[0].mxu0
    %v262 = vadd.f32 0.0, %v261
    %v263 = vpop.f32.mrb[0].mxu0
    %264 = vmatprep.mubr.bf16.mxu0 0
    %265 = vmatmul.mubr.bf16.gmra.mrb[0].mxu0 %v131
    %v266 = vpop.f32.mrb[0].mxu0
    %v267 = vadd.f32 0.0, %v266
    %v268 = vpop.f32.mrb[0].mxu0
    %v269 = vpop.f32.mrb[0].mxu0
    %v270 = vadd.f32 0.0, %v269
    %v271 = vpop.f32.mrb[0].mxu0
    %272 = vmatprep.mubr.bf16.mxu0 0
    %273 = vmatmul.mubr.bf16.gmra.mrb[0].mxu0 %v132
    %v274 = vpop.f32.mrb[0].mxu0
    %v275 = vadd.f32 0.0, %v274
    %v276 = vpop.f32.mrb[0].mxu0
    %v277 = vpop.f32.mrb[0].mxu0
    %v278 = vadd.f32 0.0, %v277
    %v279 = vpop.f32.mrb[0].mxu0
    %280 = vmatprep.mubr.bf16.mxu0 0
    %281 = vmatmul.mubr.bf16.gmra.mrb[0].mxu0 %v133
    %v282 = vpop.f32.mrb[0].mxu0
    %v283 = vadd.f32 0.0, %v282
    %v284 = vpop.f32.mrb[0].mxu0
    %v285 = vpop.f32.mrb[0].mxu0
    %v286 = vadd.f32 0.0, %v285
    %v287 = vpop.f32.mrb[0].mxu0
    %288 = vmatprep.mubr.bf16.mxu0 0
    %289 = vmatmul.mubr.bf16.gmra.mrb[0].mxu0 %v134
    %v290 = vpop.f32.mrb[0].mxu0
    %v291 = vadd.f32 0.0, %v290
    %v292 = vpop.f32.mrb[0].mxu0
    %v293 = vpop.f32.mrb[0].mxu0
    %v294 = vadd.f32 0.0, %v293
    %v295 = vpop.f32.mrb[0].mxu0
    %296 = vmatprep.mubr.bf16.mxu0 0
    %297 = vmatmul.mubr.bf16.gmra.mrb[0].mxu0 %v135
    %v298 = vpop.f32.mrb[0].mxu0
    %v299 = vadd.f32 0.0, %v298
    %v300 = vpop.f32.mrb[0].mxu0
    %v301 = vpop.f32.mrb[0].mxu0
    %v302 = vadd.f32 0.0, %v301
    %v303 = vpop.f32.mrb[0].mxu0
    %304 = vmatprep.mubr.bf16.mxu0 0
    %305 = vmatmul.mubr.bf16.gmra.mrb[0].mxu0 %v136
    %v306 = vpop.f32.mrb[0].mxu0
    %v307 = vadd.f32 0.0, %v306
    %v308 = vpop.f32.mrb[0].mxu0
    %v309 = vpop.f32.mrb[0].mxu0
    %v310 = vadd.f32 0.0, %v309
    %v311 = vpop.f32.mrb[0].mxu0
    %312 = vmatprep.mubr.bf16.mxu0 0
    %313 = vmatmul.mubr.bf16.gmra.mrb[0].mxu0 %v137
    %v314 = vpop.f32.mrb[0].mxu0
    %v315 = vadd.f32 0.0, %v314
    %v316 = vpop.f32.mrb[0].mxu0
    %v317 = vpop.f32.mrb[0].mxu0
    %v318 = vadd.f32 0.0, %v317
    %v319 = vpop.f32.mrb[0].mxu0
    %320 = vmatprep.mubr.bf16.mxu0 0
    %321 = vmatmul.mubr.bf16.gmra.mrb[0].mxu0 %v138
    %v322 = vpop.f32.mrb[0].mxu0
    %v323 = vadd.f32 0.0, %v322
    %v324 = vpop.f32.mrb[0].mxu0
    %v325 = vpop.f32.mrb[0].mxu0
    %v326 = vadd.f32 0.0, %v325
    %v327 = vpop.f32.mrb[0].mxu0
    %328 = vmatprep.mubr.bf16.mxu0 0
    %329 = vmatmul.mubr.bf16.gmra.mrb[0].mxu0 %v139
    %v330 = vpop.f32.mrb[0].mxu0
    %v331 = vadd.f32 0.0, %v330
    %v332 = vpop.f32.mrb[0].mxu0
    %v333 = vpop.f32.mrb[0].mxu0
    %v334 = vadd.f32 0.0, %v333
    %v335 = vpop.f32.mrb[0].mxu0
    %336 = vmatprep.mubr.bf16.mxu0 0
    %337 = vmatmul.mubr.bf16.gmra.mrb[0].mxu0 %v140
    %v338 = vpop.f32.mrb[0].mxu0
    %v339 = vadd.f32 0.0, %v338
    %v340 = vpop.f32.mrb[0].mxu0
    %v341 = vpop.f32.mrb[0].mxu0
    %v342 = vadd.f32 0.0, %v341
    %v343 = vpop.f32.mrb[0].mxu0
    %344 = vmatprep.mubr.bf16.mxu0 0
    %345 = vmatmul.mubr.bf16.gmra.mrb[0].mxu0 %v141
    %v346 = vpop.f32.mrb[0].mxu0
    %v347 = vadd.f32 0.0, %v346
    %v348 = vpop.f32.mrb[0].mxu0
    %v349 = vpop.f32.mrb[0].mxu0
    %v350 = vadd.f32 0.0, %v349
    %v351 = vpop.f32.mrb[0].mxu0
    %352 = vmatprep.mubr.bf16.mxu0 0
    %353 = vmatmul.mubr.bf16.gmra.mrb[0].mxu0 %v142
    %v354 = vpop.f32.mrb[0].mxu0
    %v355 = vadd.f32 0.0, %v354
    %v356 = vpop.f32.mrb[0].mxu0
    %v357 = vpop.f32.mrb[0].mxu0
    %v358 = vadd.f32 0.0, %v357
    %v359 = vpop.f32.mrb[0].mxu0
    %360 = vmatprep.mubr.bf16.mxu0 0
    %361 = vmatmul.mubr.bf16.gmra.mrb[0].mxu0 %v143
    %v362 = vpop.f32.mrb[0].mxu0
    %v363 = vadd.f32 0.0, %v362
    %v364 = vpop.f32.mrb[0].mxu0
    %v365 = vpop.f32.mrb[0].mxu0
    %v366 = vadd.f32 0.0, %v365
    %v367 = vpop.f32.mrb[0].mxu0
    %368 = vdwg.mxu0
    %v369 = vld [vmem:[#allocation2] sm:$0xff]
    %v370 = vld [vmem:[#allocation2 + $0x8] sm:$0xff]
    %v371 = vld [vmem:[#allocation2 + $0x10] sm:$0xff]
    %v372 = vld [vmem:[#allocation2 + $0x18] sm:$0xff]
    %v373 = vld [vmem:[#allocation2 + $0x20] sm:$0xff]
    %v374 = vld [vmem:[#allocation2 + $0x28] sm:$0xff]
    %v375 = vld [vmem:[#allocation2 + $0x30] sm:$0xff]
    %v376 = vld [vmem:[#allocation2 + $0x38] sm:$0xff]
    %v377 = vld [vmem:[#allocation2 + $0x40] sm:$0xff]
    %v378 = vld [vmem:[#allocation2 + $0x48] sm:$0xff]
    %v379 = vld [vmem:[#allocation2 + $0x50] sm:$0xff]
    %v380 = vld [vmem:[#allocation2 + $0x58] sm:$0xff]
    %v381 = vld [vmem:[#allocation2 + $0x60] sm:$0xff]
    %v382 = vld [vmem:[#allocation2 + $0x68] sm:$0xff]
    %v383 = vld [vmem:[#allocation2 + $0x70] sm:$0xff]
    %v384 = vld [vmem:[#allocation2 + $0x78] sm:$0xff]
    %v385 = vld [vmem:[#allocation2 + $0x80] sm:$0xff]
    %v386 = vld [vmem:[#allocation2 + $0x88] sm:$0xff]
    %v387 = vld [vmem:[#allocation2 + $0x90] sm:$0xff]
    %v388 = vld [vmem:[#allocation2 + $0x98] sm:$0xff]
    %v389 = vld [vmem:[#allocation2 + $0xa0] sm:$0xff]
    %v390 = vld [vmem:[#allocation2 + $0xa8] sm:$0xff]
    %v391 = vld [vmem:[#allocation2 + $0xb0] sm:$0xff]
    %v392 = vld [vmem:[#allocation2 + $0xb8] sm:$0xff]
    %v393 = vld [vmem:[#allocation2 + $0xc0] sm:$0xff]
    %v394 = vld [vmem:[#allocation2 + $0xc8] sm:$0xff]
    %v395 = vld [vmem:[#allocation2 + $0xd0] sm:$0xff]
    %v396 = vld [vmem:[#allocation2 + $0xd8] sm:$0xff]
    %v397 = vld [vmem:[#allocation2 + $0xe0] sm:$0xff]
    %v398 = vld [vmem:[#allocation2 + $0xe8] sm:$0xff]
    %v399 = vld [vmem:[#allocation2 + $0xf0] sm:$0xff]
    %v400 = vld [vmem:[#allocation2 + $0xf8] sm:$0xff]
    %v401 = vld [vmem:[#allocation3] sm:$0xff]
    %v402 = vld [vmem:[#allocation3 + $0x8] sm:$0xff]
    %v403 = vld [vmem:[#allocation3 + $0x10] sm:$0xff]
    %v404 = vld [vmem:[#allocation3 + $0x18] sm:$0xff]
    %v405 = vld [vmem:[#allocation3 + $0x20] sm:$0xff]
    %v406 = vld [vmem:[#allocation3 + $0x28] sm:$0xff]
    %v407 = vld [vmem:[#allocation3 + $0x30] sm:$0xff]
    %v408 = vld [vmem:[#allocation3 + $0x38] sm:$0xff]
    %v409 = vld [vmem:[#allocation3 + $0x40] sm:$0xff]
    %v410 = vld [vmem:[#allocation3 + $0x48] sm:$0xff]
    %v411 = vld [vmem:[#allocation3 + $0x50] sm:$0xff]
    %v412 = vld [vmem:[#allocation3 + $0x58] sm:$0xff]
    %v413 = vld [vmem:[#allocation3 + $0x60] sm:$0xff]
    %v414 = vld [vmem:[#allocation3 + $0x68] sm:$0xff]
    %v415 = vld [vmem:[#allocation3 + $0x70] sm:$0xff]
    %v416 = vld [vmem:[#allocation3 + $0x78] sm:$0xff]
    %v417 = vld [vmem:[#allocation3 + $0x80] sm:$0xff]
    %v418 = vld [vmem:[#allocation3 + $0x88] sm:$0xff]
    %v419 = vld [vmem:[#allocation3 + $0x90] sm:$0xff]
    %v420 = vld [vmem:[#allocation3 + $0x98] sm:$0xff]
    %v421 = vld [vmem:[#allocation3 + $0xa0] sm:$0xff]
    %v422 = vld [vmem:[#allocation3 + $0xa8] sm:$0xff]
    %v423 = vld [vmem:[#allocation3 + $0xb0] sm:$0xff]
    %v424 = vld [vmem:[#allocation3 + $0xb8] sm:$0xff]
    %v425 = vld [vmem:[#allocation3 + $0xc0] sm:$0xff]
    %v426 = vld [vmem:[#allocation3 + $0xc8] sm:$0xff]
    %v427 = vld [vmem:[#allocation3 + $0xd0] sm:$0xff]
    %v428 = vld [vmem:[#allocation3 + $0xd8] sm:$0xff]
    %v429 = vld [vmem:[#allocation3 + $0xe0] sm:$0xff]
    %v430 = vld [vmem:[#allocation3 + $0xe8] sm:$0xff]
    %v431 = vld [vmem:[#allocation3 + $0xf0] sm:$0xff]
    %v432 = vld [vmem:[#allocation3 + $0xf8] sm:$0xff]
    %v433 = vpack.c.bf16 %v246, %v243
    %v434 = vpack.c.bf16 %v254, %v251
    %v435 = vpack.c.bf16 %v262, %v259
    %v436 = vpack.c.bf16 %v270, %v267
    %v437 = vpack.c.bf16 %v278, %v275
    %v438 = vpack.c.bf16 %v286, %v283
    %v439 = vpack.c.bf16 %v294, %v291
    %v440 = vpack.c.bf16 %v302, %v299
    %v441 = vpack.c.bf16 %v310, %v307
    %v442 = vpack.c.bf16 %v318, %v315
    %v443 = vpack.c.bf16 %v326, %v323
    %v444 = vpack.c.bf16 %v334, %v331
    %v445 = vpack.c.bf16 %v342, %v339
    %v446 = vpack.c.bf16 %v350, %v347
    %v447 = vpack.c.bf16 %v358, %v355
    %v448 = vpack.c.bf16 %v366, %v363
    %v481 = vunpack.c.l.b16 %v401
    %v482 = vunpack.c.h.b16 %v401
    %v483 = vunpack.c.l.b16 %v402
    %v484 = vunpack.c.h.b16 %v402
    %v485 = vunpack.c.l.b16 %v403
    %v486 = vunpack.c.h.b16 %v403
    %v487 = vunpack.c.l.b16 %v404
    %v488 = vunpack.c.h.b16 %v404
    %v489 = vunpack.c.l.b16 %v405
    %v490 = vunpack.c.h.b16 %v405
    %v491 = vunpack.c.l.b16 %v406
    %v492 = vunpack.c.h.b16 %v406
    %v493 = vunpack.c.l.b16 %v407
    %v494 = vunpack.c.h.b16 %v407
    %v495 = vunpack.c.l.b16 %v408
    %v496 = vunpack.c.h.b16 %v408
    %v497 = vunpack.c.l.b16 %v409
    %v498 = vunpack.c.h.b16 %v409
    %v499 = vunpack.c.l.b16 %v410
    %v500 = vunpack.c.h.b16 %v410
    %v501 = vunpack.c.l.b16 %v411
    %v502 = vunpack.c.h.b16 %v411
    %v503 = vunpack.c.l.b16 %v412
    %v504 = vunpack.c.h.b16 %v412
    %v505 = vunpack.c.l.b16 %v413
    %v506 = vunpack.c.h.b16 %v413
    %v507 = vunpack.c.l.b16 %v414
    %v508 = vunpack.c.h.b16 %v414
    %v509 = vunpack.c.l.b16 %v415
    %v510 = vunpack.c.h.b16 %v415
    %v511 = vunpack.c.l.b16 %v416
    %v512 = vunpack.c.h.b16 %v416
    %v513 = vunpack.c.l.b16 %v417
    %v514 = vunpack.c.h.b16 %v417
    %v515 = vunpack.c.l.b16 %v418
    %v516 = vunpack.c.h.b16 %v418
    %v517 = vunpack.c.l.b16 %v419
    %v518 = vunpack.c.h.b16 %v419
    %v519 = vunpack.c.l.b16 %v420
    %v520 = vunpack.c.h.b16 %v420
    %v521 = vunpack.c.l.b16 %v421
    %v522 = vunpack.c.h.b16 %v421
    %v523 = vunpack.c.l.b16 %v422
    %v524 = vunpack.c.h.b16 %v422
    %v525 = vunpack.c.l.b16 %v423
    %v526 = vunpack.c.h.b16 %v423
    %v527 = vunpack.c.l.b16 %v424
    %v528 = vunpack.c.h.b16 %v424
    %v529 = vunpack.c.l.b16 %v425
    %v530 = vunpack.c.h.b16 %v425
    %v531 = vunpack.c.l.b16 %v426
    %v532 = vunpack.c.h.b16 %v426
    %v533 = vunpack.c.l.b16 %v427
    %v534 = vunpack.c.h.b16 %v427
    %v535 = vunpack.c.l.b16 %v428
    %v536 = vunpack.c.h.b16 %v428
    %v537 = vunpack.c.l.b16 %v429
    %v538 = vunpack.c.h.b16 %v429
    %v539 = vunpack.c.l.b16 %v430
    %v540 = vunpack.c.h.b16 %v430
    %v541 = vunpack.c.l.b16 %v431
    %v542 = vunpack.c.h.b16 %v431
    %v543 = vunpack.c.l.b16 %v432
    %v544 = vunpack.c.h.b16 %v432
    %v545 = vpack.c.b16 %v483, %v481
    %v546 = vpack.c.b16 %v484, %v482
    %v547 = vpack.c.b16 %v487, %v485
    %v548 = vpack.c.b16 %v488, %v486
    %v549 = vpack.c.b16 %v491, %v489
    %v550 = vpack.c.b16 %v492, %v490
    %v551 = vpack.c.b16 %v495, %v493
    %v552 = vpack.c.b16 %v496, %v494
    %v553 = vpack.c.b16 %v499, %v497
    %v554 = vpack.c.b16 %v500, %v498
    %v555 = vpack.c.b16 %v503, %v501
    %v556 = vpack.c.b16 %v504, %v502
    %v557 = vpack.c.b16 %v507, %v505
    %v558 = vpack.c.b16 %v508, %v506
    %v559 = vpack.c.b16 %v511, %v509
    %v560 = vpack.c.b16 %v512, %v510
    %v561 = vpack.c.b16 %v515, %v513
    %v562 = vpack.c.b16 %v516, %v514
    %v563 = vpack.c.b16 %v519, %v517
    %v564 = vpack.c.b16 %v520, %v518
    %v565 = vpack.c.b16 %v523, %v521
    %v566 = vpack.c.b16 %v524, %v522
    %v567 = vpack.c.b16 %v527, %v525
    %v568 = vpack.c.b16 %v528, %v526
    %v569 = vpack.c.b16 %v531, %v529
    %v570 = vpack.c.b16 %v532, %v530
    %v571 = vpack.c.b16 %v535, %v533
    %v572 = vpack.c.b16 %v536, %v534
    %v573 = vpack.c.b16 %v539, %v537
    %v574 = vpack.c.b16 %v540, %v538
    %v575 = vpack.c.b16 %v543, %v541
    %v576 = vpack.c.b16 %v544, %v542
    %609 = vmatprep.subr.bf16.mxu0 0
    %610 = vmatpush1.bf16.msra.mxu0 %v433
    %611 = vmatprep.subr.bf16.mxu0 0
    %612 = vmatpush1.bf16.msra.mxu0 %v434
    %613 = vmatprep.subr.bf16.mxu0 0
    %614 = vmatpush1.bf16.msra.mxu0 %v435
    %615 = vmatprep.subr.bf16.mxu0 0
    %616 = vmatpush1.bf16.msra.mxu0 %v436
    %617 = vmatprep.subr.bf16.mxu0 0
    %618 = vmatpush1.bf16.msra.mxu0 %v437
    %619 = vmatprep.subr.bf16.mxu0 0
    %620 = vmatpush1.bf16.msra.mxu0 %v438
    %621 = vmatprep.subr.bf16.mxu0 0
    %622 = vmatpush1.bf16.msra.mxu0 %v439
    %623 = vmatprep.subr.bf16.mxu0 0
    %624 = vmatpush1.bf16.msra.mxu0 %v440
    %625 = vmatprep.subr.bf16.mxu0 0
    %626 = vmatpush1.bf16.msra.mxu0 %v441
    %627 = vmatprep.subr.bf16.mxu0 0
    %628 = vmatpush1.bf16.msra.mxu0 %v442
    %629 = vmatprep.subr.bf16.mxu0 0
    %630 = vmatpush1.bf16.msra.mxu0 %v443
    %631 = vmatprep.subr.bf16.mxu0 0
    %632 = vmatpush1.bf16.msra.mxu0 %v444
    %633 = vmatprep.subr.bf16.mxu0 0
    %634 = vmatpush1.bf16.msra.mxu0 %v445
    %635 = vmatprep.subr.bf16.mxu0 0
    %636 = vmatpush1.bf16.msra.mxu0 %v446
    %637 = vmatprep.subr.bf16.mxu0 0
    %638 = vmatpush1.bf16.msra.mxu0 %v447
    %639 = vmatprep.subr.bf16.mxu0 0
    %640 = vmatpush1.bf16.msra.mxu0 %v448
    %641 = vmatprep.mubr.bf16.mxu0 %v546
    %642 = vmatmul.mubr.bf16.gmra.mrb[0].mxu0 %v545
    %v643 = vpop.f32.mrb[0].mxu0
    %v644 = vadd.f32 0.0, %v643
    %v645 = vpop.f32.mrb[0].mxu0
    %v646 = vpop.f32.mrb[0].mxu0
    %v647 = vadd.f32 0.0, %v646
    %v648 = vpop.f32.mrb[0].mxu0
    %649 = vmatprep.mubr.bf16.mxu0 %v548
    %650 = vmatmul.mubr.bf16.gmra.mrb[0].mxu0 %v547
    %v651 = vpop.f32.mrb[0].mxu0
    %v652 = vadd.f32 0.0, %v651
    %v653 = vpop.f32.mrb[0].mxu0
    %v654 = vpop.f32.mrb[0].mxu0
    %v655 = vadd.f32 0.0, %v654
    %v656 = vpop.f32.mrb[0].mxu0
    %657 = vmatprep.mubr.bf16.mxu0 %v550
    %658 = vmatmul.mubr.bf16.gmra.mrb[0].mxu0 %v549
    %v659 = vpop.f32.mrb[0].mxu0
    %v660 = vadd.f32 0.0, %v659
    %v661 = vpop.f32.mrb[0].mxu0
    %v662 = vpop.f32.mrb[0].mxu0
    %v663 = vadd.f32 0.0, %v662
    %v664 = vpop.f32.mrb[0].mxu0
    %665 = vmatprep.mubr.bf16.mxu0 %v552
    %666 = vmatmul.mubr.bf16.gmra.mrb[0].mxu0 %v551
    %v667 = vpop.f32.mrb[0].mxu0
    %v668 = vadd.f32 0.0, %v667
    %v669 = vpop.f32.mrb[0].mxu0
    %v670 = vpop.f32.mrb[0].mxu0
    %v671 = vadd.f32 0.0, %v670
    %v672 = vpop.f32.mrb[0].mxu0
    %673 = vmatprep.mubr.bf16.mxu0 %v554
    %674 = vmatmul.mubr.bf16.gmra.mrb[0].mxu0 %v553
    %v675 = vpop.f32.mrb[0].mxu0
    %v676 = vadd.f32 0.0, %v675
    %v677 = vpop.f32.mrb[0].mxu0
    %v678 = vpop.f32.mrb[0].mxu0
    %v679 = vadd.f32 0.0, %v678
    %v680 = vpop.f32.mrb[0].mxu0
    %681 = vmatprep.mubr.bf16.mxu0 %v556
    %682 = vmatmul.mubr.bf16.gmra.mrb[0].mxu0 %v555
    %v683 = vpop.f32.mrb[0].mxu0
    %v684 = vadd.f32 0.0, %v683
    %v685 = vpop.f32.mrb[0].mxu0
    %v686 = vpop.f32.mrb[0].mxu0
    %v687 = vadd.f32 0.0, %v686
    %v688 = vpop.f32.mrb[0].mxu0
    %689 = vmatprep.mubr.bf16.mxu0 %v558
    %690 = vmatmul.mubr.bf16.gmra.mrb[0].mxu0 %v557
    %v691 = vpop.f32.mrb[0].mxu0
    %v692 = vadd.f32 0.0, %v691
    %v693 = vpop.f32.mrb[0].mxu0
    %v694 = vpop.f32.mrb[0].mxu0
    %v695 = vadd.f32 0.0, %v694
    %v696 = vpop.f32.mrb[0].mxu0
    %697 = vmatprep.mubr.bf16.mxu0 %v560
    %698 = vmatmul.mubr.bf16.gmra.mrb[0].mxu0 %v559
    %v699 = vpop.f32.mrb[0].mxu0
    %v700 = vadd.f32 0.0, %v699
    %v701 = vpop.f32.mrb[0].mxu0
    %v702 = vpop.f32.mrb[0].mxu0
    %v703 = vadd.f32 0.0, %v702
    %v704 = vpop.f32.mrb[0].mxu0
    %705 = vmatprep.mubr.bf16.mxu0 %v562
    %706 = vmatmul.mubr.bf16.gmra.mrb[0].mxu0 %v561
    %v707 = vpop.f32.mrb[0].mxu0
    %v708 = vadd.f32 0.0, %v707
    %v709 = vpop.f32.mrb[0].mxu0
    %v710 = vpop.f32.mrb[0].mxu0
    %v711 = vadd.f32 0.0, %v710
    %v712 = vpop.f32.mrb[0].mxu0
    %713 = vmatprep.mubr.bf16.mxu0 %v564
    %714 = vmatmul.mubr.bf16.gmra.mrb[0].mxu0 %v563
    %v715 = vpop.f32.mrb[0].mxu0
    %v716 = vadd.f32 0.0, %v715
    %v717 = vpop.f32.mrb[0].mxu0
    %v718 = vpop.f32.mrb[0].mxu0
    %v719 = vadd.f32 0.0, %v718
    %v720 = vpop.f32.mrb[0].mxu0
    %721 = vmatprep.mubr.bf16.mxu0 %v566
    %722 = vmatmul.mubr.bf16.gmra.mrb[0].mxu0 %v565
    %v723 = vpop.f32.mrb[0].mxu0
    %v724 = vadd.f32 0.0, %v723
    %v725 = vpop.f32.mrb[0].mxu0
    %v726 = vpop.f32.mrb[0].mxu0
    %v727 = vadd.f32 0.0, %v726
    %v728 = vpop.f32.mrb[0].mxu0
    %729 = vmatprep.mubr.bf16.mxu0 %v568
    %730 = vmatmul.mubr.bf16.gmra.mrb[0].mxu0 %v567
    %v731 = vpop.f32.mrb[0].mxu0
    %v732 = vadd.f32 0.0, %v731
    %v733 = vpop.f32.mrb[0].mxu0
    %v734 = vpop.f32.mrb[0].mxu0
    %v735 = vadd.f32 0.0, %v734
    %v736 = vpop.f32.mrb[0].mxu0
    %737 = vmatprep.mubr.bf16.mxu0 %v570
    %738 = vmatmul.mubr.bf16.gmra.mrb[0].mxu0 %v569
    %v739 = vpop.f32.mrb[0].mxu0
    %v740 = vadd.f32 0.0, %v739
    %v741 = vpop.f32.mrb[0].mxu0
    %v742 = vpop.f32.mrb[0].mxu0
    %v743 = vadd.f32 0.0, %v742
    %v744 = vpop.f32.mrb[0].mxu0
    %745 = vmatprep.mubr.bf16.mxu0 %v572
    %746 = vmatmul.mubr.bf16.gmra.mrb[0].mxu0 %v571
    %v747 = vpop.f32.mrb[0].mxu0
    %v748 = vadd.f32 0.0, %v747
    %v749 = vpop.f32.mrb[0].mxu0
    %v750 = vpop.f32.mrb[0].mxu0
    %v751 = vadd.f32 0.0, %v750
    %v752 = vpop.f32.mrb[0].mxu0
    %753 = vmatprep.mubr.bf16.mxu0 %v574
    %754 = vmatmul.mubr.bf16.gmra.mrb[0].mxu0 %v573
    %v755 = vpop.f32.mrb[0].mxu0
    %v756 = vadd.f32 0.0, %v755
    %v757 = vpop.f32.mrb[0].mxu0
    %v758 = vpop.f32.mrb[0].mxu0
    %v759 = vadd.f32 0.0, %v758
    %v760 = vpop.f32.mrb[0].mxu0
    %761 = vmatprep.mubr.bf16.mxu0 %v576
    %762 = vmatmul.mubr.bf16.gmra.mrb[0].mxu0 %v575
    %v763 = vpop.f32.mrb[0].mxu0
    %v764 = vadd.f32 0.0, %v763
    %v765 = vpop.f32.mrb[0].mxu0
    %v766 = vpop.f32.mrb[0].mxu0
    %v767 = vadd.f32 0.0, %v766
    %v768 = vpop.f32.mrb[0].mxu0
    %769 = vdwg.mxu0
    %v770 = vadd.f32 %v369, %v644
    %v771 = vadd.f32 %v370, %v647
    %v772 = vadd.f32 %v371, %v652
    %v773 = vadd.f32 %v372, %v655
    %v774 = vadd.f32 %v373, %v660
    %v775 = vadd.f32 %v374, %v663
    %v776 = vadd.f32 %v375, %v668
    %v777 = vadd.f32 %v376, %v671
    %v778 = vadd.f32 %v377, %v676
    %v779 = vadd.f32 %v378, %v679
    %v780 = vadd.f32 %v379, %v684
    %v781 = vadd.f32 %v380, %v687
    %v782 = vadd.f32 %v381, %v692
    %v783 = vadd.f32 %v382, %v695
    %v784 = vadd.f32 %v383, %v700
    %v785 = vadd.f32 %v384, %v703
    %v786 = vadd.f32 %v385, %v708
    %v787 = vadd.f32 %v386, %v711
    %v788 = vadd.f32 %v387, %v716
    %v789 = vadd.f32 %v388, %v719
    %v790 = vadd.f32 %v389, %v724
    %v791 = vadd.f32 %v390, %v727
    %v792 = vadd.f32 %v391, %v732
    %v793 = vadd.f32 %v392, %v735
    %v794 = vadd.f32 %v393, %v740
    %v795 = vadd.f32 %v394, %v743
    %v796 = vadd.f32 %v395, %v748
    %v797 = vadd.f32 %v396, %v751
    %v798 = vadd.f32 %v397, %v756
    %v799 = vadd.f32 %v398, %v759
    %v800 = vadd.f32 %v399, %v764
    %v801 = vadd.f32 %v400, %v767
    %802 = vst [vmem:[#allocation2] sm:$0xff] %v770
    %803 = vst [vmem:[#allocation2 + $0x8] sm:$0xff] %v771
    %804 = vst [vmem:[#allocation2 + $0x10] sm:$0xff] %v772
    %805 = vst [vmem:[#allocation2 + $0x18] sm:$0xff] %v773
    %806 = vst [vmem:[#allocation2 + $0x20] sm:$0xff] %v774
    %807 = vst [vmem:[#allocation2 + $0x28] sm:$0xff] %v775
    %808 = vst [vmem:[#allocation2 + $0x30] sm:$0xff] %v776
    %809 = vst [vmem:[#allocation2 + $0x38] sm:$0xff] %v777
    %810 = vst [vmem:[#allocation2 + $0x40] sm:$0xff] %v778
    %811 = vst [vmem:[#allocation2 + $0x48] sm:$0xff] %v779
    %812 = vst [vmem:[#allocation2 + $0x50] sm:$0xff] %v780
    %813 = vst [vmem:[#allocation2 + $0x58] sm:$0xff] %v781
    %814 = vst [vmem:[#allocation2 + $0x60] sm:$0xff] %v782
    %815 = vst [vmem:[#allocation2 + $0x68] sm:$0xff] %v783
    %816 = vst [vmem:[#allocation2 + $0x70] sm:$0xff] %v784
    %817 = vst [vmem:[#allocation2 + $0x78] sm:$0xff] %v785
    %818 = vst [vmem:[#allocation2 + $0x80] sm:$0xff] %v786
    %819 = vst [vmem:[#allocation2 + $0x88] sm:$0xff] %v787
    %820 = vst [vmem:[#allocation2 + $0x90] sm:$0xff] %v788
    %821 = vst [vmem:[#allocation2 + $0x98] sm:$0xff] %v789
    %822 = vst [vmem:[#allocation2 + $0xa0] sm:$0xff] %v790
    %823 = vst [vmem:[#allocation2 + $0xa8] sm:$0xff] %v791
    %824 = vst [vmem:[#allocation2 + $0xb0] sm:$0xff] %v792
    %825 = vst [vmem:[#allocation2 + $0xb8] sm:$0xff] %v793
    %826 = vst [vmem:[#allocation2 + $0xc0] sm:$0xff] %v794
    %827 = vst [vmem:[#allocation2 + $0xc8] sm:$0xff] %v795
    %828 = vst [vmem:[#allocation2 + $0xd0] sm:$0xff] %v796
    %829 = vst [vmem:[#allocation2 + $0xd8] sm:$0xff] %v797
    %830 = vst [vmem:[#allocation2 + $0xe0] sm:$0xff] %v798
    %831 = vst [vmem:[#allocation2 + $0xe8] sm:$0xff] %v799
    %832 = vst [vmem:[#allocation2 + $0xf0] sm:$0xff] %v800
    %833 = vst [vmem:[#allocation2 + $0xf8] sm:$0xff] %v801
    // Predicated region
    $region34: #{tpu_custom_call.1} parent=1 // pred_check
      %p834 = pneg %p60
    $region35: #{tpu_custom_call.1} parent=1 // pred_check_branch
      %836 = sbr.rel (%p834) target = $region37
    $region36: #{tpu_custom_call.1} parent=1 // pred_region
      %v837 = vld [vmem:[#allocation2] sm:$0xff]
      %v838 = vld [vmem:[#allocation2 + $0x8] sm:$0xff]
      %v839 = vld [vmem:[#allocation2 + $0x10] sm:$0xff]
      %v840 = vld [vmem:[#allocation2 + $0x18] sm:$0xff]
      %v841 = vld [vmem:[#allocation2 + $0x20] sm:$0xff]
      %v842 = vld [vmem:[#allocation2 + $0x28] sm:$0xff]
      %v843 = vld [vmem:[#allocation2 + $0x30] sm:$0xff]
      %v844 = vld [vmem:[#allocation2 + $0x38] sm:$0xff]
      %v845 = vld [vmem:[#allocation2 + $0x40] sm:$0xff]
      %v846 = vld [vmem:[#allocation2 + $0x48] sm:$0xff]
      %v847 = vld [vmem:[#allocation2 + $0x50] sm:$0xff]
      %v848 = vld [vmem:[#allocation2 + $0x58] sm:$0xff]
      %v849 = vld [vmem:[#allocation2 + $0x60] sm:$0xff]
      %v850 = vld [vmem:[#allocation2 + $0x68] sm:$0xff]
      %v851 = vld [vmem:[#allocation2 + $0x70] sm:$0xff]
      %v852 = vld [vmem:[#allocation2 + $0x78] sm:$0xff]
      %v853 = vld [vmem:[#allocation2 + $0x80] sm:$0xff]
      %v854 = vld [vmem:[#allocation2 + $0x88] sm:$0xff]
      %v855 = vld [vmem:[#allocation2 + $0x90] sm:$0xff]
      %v856 = vld [vmem:[#allocation2 + $0x98] sm:$0xff]
      %v857 = vld [vmem:[#allocation2 + $0xa0] sm:$0xff]
      %v858 = vld [vmem:[#allocation2 + $0xa8] sm:$0xff]
      %v859 = vld [vmem:[#allocation2 + $0xb0] sm:$0xff]
      %v860 = vld [vmem:[#allocation2 + $0xb8] sm:$0xff]
      %v861 = vld [vmem:[#allocation2 + $0xc0] sm:$0xff]
      %v862 = vld [vmem:[#allocation2 + $0xc8] sm:$0xff]
      %v863 = vld [vmem:[#allocation2 + $0xd0] sm:$0xff]
      %v864 = vld [vmem:[#allocation2 + $0xd8] sm:$0xff]
      %v865 = vld [vmem:[#allocation2 + $0xe0] sm:$0xff]
      %v866 = vld [vmem:[#allocation2 + $0xe8] sm:$0xff]
      %v867 = vld [vmem:[#allocation2 + $0xf0] sm:$0xff]
      %v868 = vld [vmem:[#allocation2 + $0xf8] sm:$0xff]
      %v869 = vld [vmem:[%s3] sm:$0x1]
      %v871 = vlaneseq
      %v872 = vshrl.u32 %v871, 7
      %v873 = vsub.s32 0, %v872
      %v874 = vrot.slane %v869, %v873
      %v876 = vadd.f32 %v837, %v874
      %v877 = vadd.f32 %v838, %v874
      %v878 = vadd.f32 %v839, %v874
      %v879 = vadd.f32 %v840, %v874
      %v880 = vadd.f32 %v841, %v874
      %v881 = vadd.f32 %v842, %v874
      %v882 = vadd.f32 %v843, %v874
      %v883 = vadd.f32 %v844, %v874
      %v884 = vadd.f32 %v845, %v874
      %v885 = vadd.f32 %v846, %v874
      %v886 = vadd.f32 %v847, %v874
      %v887 = vadd.f32 %v848, %v874
      %v888 = vadd.f32 %v849, %v874
      %v889 = vadd.f32 %v850, %v874
      %v890 = vadd.f32 %v851, %v874
      %v891 = vadd.f32 %v852, %v874
      %v892 = vadd.f32 %v853, %v874
      %v893 = vadd.f32 %v854, %v874
      %v894 = vadd.f32 %v855, %v874
      %v895 = vadd.f32 %v856, %v874
      %v896 = vadd.f32 %v857, %v874
      %v897 = vadd.f32 %v858, %v874
      %v898 = vadd.f32 %v859, %v874
      %v899 = vadd.f32 %v860, %v874
      %v900 = vadd.f32 %v861, %v874
      %v901 = vadd.f32 %v862, %v874
      %v902 = vadd.f32 %v863, %v874
      %v903 = vadd.f32 %v864, %v874
      %v904 = vadd.f32 %v865, %v874
      %v905 = vadd.f32 %v866, %v874
      %v906 = vadd.f32 %v867, %v874
      %v907 = vadd.f32 %v868, %v874
      %908 = vst [vmem:[#allocation9] sm:$0xff] %v876
      %909 = vst [vmem:[#allocation9 + $0x8] sm:$0xff] %v877
      %910 = vst [vmem:[#allocation9 + $0x10] sm:$0xff] %v878
      %911 = vst [vmem:[#allocation9 + $0x18] sm:$0xff] %v879
      %912 = vst [vmem:[#allocation9 + $0x20] sm:$0xff] %v880
      %913 = vst [vmem:[#allocation9 + $0x28] sm:$0xff] %v881
      %914 = vst [vmem:[#allocation9 + $0x30] sm:$0xff] %v882
      %915 = vst [vmem:[#allocation9 + $0x38] sm:$0xff] %v883
      %916 = vst [vmem:[#allocation9 + $0x40] sm:$0xff] %v884
      %917 = vst [vmem:[#allocation9 + $0x48] sm:$0xff] %v885
      %918 = vst [vmem:[#allocation9 + $0x50] sm:$0xff] %v886
      %919 = vst [vmem:[#allocation9 + $0x58] sm:$0xff] %v887
      %920 = vst [vmem:[#allocation9 + $0x60] sm:$0xff] %v888
      %921 = vst [vmem:[#allocation9 + $0x68] sm:$0xff] %v889
      %922 = vst [vmem:[#allocation9 + $0x70] sm:$0xff] %v890
      %923 = vst [vmem:[#allocation9 + $0x78] sm:$0xff] %v891
      %924 = vst [vmem:[#allocation9 + $0x80] sm:$0xff] %v892
      %925 = vst [vmem:[#allocation9 + $0x88] sm:$0xff] %v893
      %926 = vst [vmem:[#allocation9 + $0x90] sm:$0xff] %v894
      %927 = vst [vmem:[#allocation9 + $0x98] sm:$0xff] %v895
      %928 = vst [vmem:[#allocation9 + $0xa0] sm:$0xff] %v896
      %929 = vst [vmem:[#allocation9 + $0xa8] sm:$0xff] %v897
      %930 = vst [vmem:[#allocation9 + $0xb0] sm:$0xff] %v898
      %931 = vst [vmem:[#allocation9 + $0xb8] sm:$0xff] %v899
      %932 = vst [vmem:[#allocation9 + $0xc0] sm:$0xff] %v900
      %933 = vst [vmem:[#allocation9 + $0xc8] sm:$0xff] %v901
      %934 = vst [vmem:[#allocation9 + $0xd0] sm:$0xff] %v902
      %935 = vst [vmem:[#allocation9 + $0xd8] sm:$0xff] %v903
      %936 = vst [vmem:[#allocation9 + $0xe0] sm:$0xff] %v904
      %937 = vst [vmem:[#allocation9 + $0xe8] sm:$0xff] %v905
      %938 = vst [vmem:[#allocation9 + $0xf0] sm:$0xff] %v906
      %939 = vst [vmem:[#allocation9 + $0xf8] sm:$0xff] %v907
    $region37: #{tpu_custom_call.1} parent=1 // pred_fallthru
      _
    // Predicated region
    $region38: #{tpu_custom_call.1} parent=1 // pred_check
      _
    $region39: #{tpu_custom_call.1} parent=1 // pred_check_branch
      %941 = sbr.rel (0) target = $region41
    $region40: #{tpu_custom_call.1} parent=1 // pred_region
      %s943 = ssub.s32 4096, 4096
      %944 = vsyncadd [#allocation5], %s943
      %s945 = sshll.u32 [#allocation9], 4
      %s946 = int_to_ptr.vmem [resolvable:$true] %s945
      %951 = dma.vmem_to_hbm [thread:$0]  %s946, 4096, %s4, [#allocation5], 128, 128, 8
    $region41: #{tpu_custom_call.1} parent=1 // pred_fallthru
      _
    // Predicated region
    $region42: #{tpu_custom_call.1} parent=1 // pred_check
      _
    $region43: #{tpu_custom_call.1} parent=1 // pred_check_branch
      %953 = sbr.rel (0) target = $region45
    $region44: #{tpu_custom_call.1} parent=1 // pred_region
      %954 = dma.done [#allocation5], 4096
    $region45: #{tpu_custom_call.1} parent=1 // pred_fallthru
      _
    %955 = vsyncpa [#allocation4], 1
    %956 = vsyncpa [#allocation7], 1
    %957 = vsyncpa [#allocation5], 1

</llo_original>
